<compile_context>
chip_gen: v7x
topology: tpu7x:2x2x1
jax: 0.10.0
libtpu: 0.0.40
codegen_flags: <defaults>
</compile_context>

<pallas_src>
import jax
import jax.numpy as jnp
from jax import lax
from jax.experimental import pallas as pl
from jax.experimental.pallas import tpu as pltpu


# ----------------------------------------------------------------------------- #
# Tile-size helpers
# ----------------------------------------------------------------------------- #
def _pick_spatial_tile(spatial):
    """Tile of the flattened feature-map (last output dim): multiple of 128 when possible
    (lane-dense stores, >=2 tiles for grid parallelism), else the full extent."""
    if spatial % 128 == 0:
        for t in (1024, 512, 256, 128):
            if spatial % t == 0 and spatial // t >= 2:
                return t
    return spatial


def _pick_tile_nc(nc):
    """How many (n, c) images the bilinear kernel processes per grid step (8-32 target),
    keeping >=2 grid programs when possible."""
    for t in (32, 16, 8, 4, 2, 1):
        if t <= nc // 2 and nc % t == 0:
            return t
    return nc


# ----------------------------------------------------------------------------- #
# Kernel 1: fused  conv3x3(s2,p1)+ReLU  ->  1x1 classifier  (logits in NCHW order)
# ----------------------------------------------------------------------------- #
def _fused_conv_classifier_kernel(p_ref, bbw_ref, bbb_ref, cwt_ref, cb_ref, o_ref):
    # feat = relu(patches @ bb_w + bb_b); stays in registers/VMEM (no HBM round-trip).
    feat = jnp.dot(p_ref[...], bbw_ref[...], preferred_element_type=jnp.float32)
    feat = jnp.maximum(feat + bbb_ref[...], 0.0)
    feat = feat.astype(cwt_ref.dtype)
    # logits^T = cls_w^T @ feat^T  (contract the feature dim of both operands) -> (C_out, T)
    logits_t = lax.dot_general(
        cwt_ref[...], feat,
        dimension_numbers=(((1,), (1,)), ((), ())),
        preferred_element_type=jnp.float32)
    o_ref[0] = (logits_t + cb_ref[...]).astype(o_ref.dtype)


def fused_conv_classifier(patches, bb_w, bb_b2d, cls_w_t, cls_b2d, *, n_images, spatial,
                          out_dtype):
    """patches: (N*spatial, K1) -> logits (N, C_out, spatial), already channel-major."""
    M, K1 = patches.shape
    assert M == n_images * spatial
    C_feat = bb_w.shape[1]
    C_out = cls_w_t.shape[0]
    assert spatial % 8 == 0 or n_images == 1, "feature-map extent must be sublane aligned"

    T = _pick_spatial_tile(spatial)
    s_tiles = spatial // T
    assert s_tiles * T == spatial

    return pl.pallas_call(
        _fused_conv_classifier_kernel,
        out_shape=jax.ShapeDtypeStruct((n_images, C_out, spatial), out_dtype),
        grid=(n_images, s_tiles),
        in_specs=[
            pl.BlockSpec((T, K1), lambda n, j: (n * s_tiles + j, 0)),
            pl.BlockSpec((K1, C_feat), lambda n, j: (0, 0)),
            pl.BlockSpec((1, C_feat), lambda n, j: (0, 0)),
            pl.BlockSpec((C_out, C_feat), lambda n, j: (0, 0)),
            pl.BlockSpec((C_out, 1), lambda n, j: (0, 0)),
        ],
        out_specs=pl.BlockSpec((1, C_out, T), lambda n, j: (n, 0, j)),
        compiler_params=pltpu.CompilerParams(
            dimension_semantics=("parallel", "parallel")),
    )(patches, bb_w, bb_b2d, cls_w_t, cls_b2d)


# ----------------------------------------------------------------------------- #
# Kernel 2: batched separable bilinear resize + tanh
# ----------------------------------------------------------------------------- #
def _bilinear_tanh_kernel(x_ref, wh_ref, wwT_ref, o_ref):
    b = x_ref.shape[0]
    x = x_ref[...]                                                 # (b, Hin, Win)
    wwT_b = jnp.broadcast_to(wwT_ref[...][None], (b,) + wwT_ref.shape)
    t = jnp.einsum('bhw,bwp->bhp', x, wwT_b,
                   preferred_element_type=jnp.float32)             # (b, Hin, Wout)
    t = t.astype(x.dtype)
    wh_b = jnp.broadcast_to(wh_ref[...][None], (b,) + wh_ref.shape)
    y = jnp.einsum('boh,bhp->bop', wh_b, t,
                   preferred_element_type=jnp.float32)             # (b, Hout, Wout)
    o_ref[...] = jnp.tanh(y).astype(o_ref.dtype)


def bilinear_tanh(x_imgs, wh, wwT, *, out_dtype):
    """x_imgs: (N*C, Hin, Win);  wh: (Hout, Hin);  wwT: (Win, Wout) ->
    tanh(resized) : (N*C, Hout, Wout)."""
    NC, Hin, Win = x_imgs.shape
    Hout = wh.shape[0]
    Wout = wwT.shape[1]
    tile_nc = _pick_tile_nc(NC)
    assert NC % tile_nc == 0

    return pl.pallas_call(
        _bilinear_tanh_kernel,
        out_shape=jax.ShapeDtypeStruct((NC, Hout, Wout), out_dtype),
        grid=(NC // tile_nc,),
        in_specs=[
            pl.BlockSpec((tile_nc, Hin, Win), lambda i: (i, 0, 0)),
            pl.BlockSpec((Hout, Hin), lambda i: (0, 0)),
            pl.BlockSpec((Win, Wout), lambda i: (0, 0)),
        ],
        out_specs=pl.BlockSpec((tile_nc, Hout, Wout), lambda i: (i, 0, 0)),
        compiler_params=pltpu.CompilerParams(dimension_semantics=("parallel",)),
    )(x_imgs, wh, wwT)


# ----------------------------------------------------------------------------- #
# JAX glue (layout plumbing, weight construction)
# ----------------------------------------------------------------------------- #
def _im2col(x, kh, kw, stride, pad):
    """x: (N, C, H, W) -> (N*Ho*Wo, C*kh*kw), feature order (C, kh, kw)."""
    N, C, H, W = x.shape
    xp = jnp.pad(x, ((0, 0), (0, 0), (pad, pad), (pad, pad)))
    Ho = (H + 2 * pad - kh) // stride + 1
    Wo = (W + 2 * pad - kw) // stride + 1
    taps = []
    for dy in range(kh):
        for dx in range(kw):
            taps.append(xp[:, :, dy:dy + stride * Ho:stride, dx:dx + stride * Wo:stride])
    p = jnp.stack(taps, axis=2)            # (N, C, kh*kw, Ho, Wo)
    p = p.transpose(0, 3, 4, 1, 2)         # (N, Ho, Wo, C, kh*kw)
    return p.reshape(N * Ho * Wo, C * kh * kw), Ho, Wo


def _bilinear_matrix(out_size, in_size, dtype=jnp.float32):
    """Row-stochastic matrix reproducing torch F.interpolate(bilinear, align_corners=False)
    along one axis: y = W @ x."""
    scale = in_size / out_size
    dst = jnp.arange(out_size, dtype=jnp.float32)
    src = (dst + 0.5) * scale - 0.5
    src = jnp.maximum(src, 0.0)                      # torch clamps negative source coords
    i0 = jnp.clip(jnp.floor(src).astype(jnp.int32), 0, in_size - 1)
    i1 = jnp.minimum(i0 + 1, in_size - 1)
    frac = src - i0.astype(jnp.float32)
    rows = jnp.arange(out_size)
    w = jnp.zeros((out_size, in_size), dtype)
    w = w.at[rows, i0].add((1.0 - frac).astype(dtype))
    w = w.at[rows, i1].add(frac.astype(dtype))
    return w


def init_params(key, c_in, c_feat, n_classes):
    """Deterministic synthetic parameters (backbone conv3x3 + classifier conv1x1)."""
    k1, k2, k3, k4 = jax.random.split(key, 4)
    bb_w = jax.random.normal(k1, (c_in * 3 * 3, c_feat), jnp.float32) * 0.2
    bb_b = jax.random.normal(k2, (c_feat,), jnp.float32) * 0.05
    cls_w = jax.random.normal(k3, (c_feat, n_classes), jnp.float32) * 0.2
    cls_b = jax.random.normal(k4, (n_classes,), jnp.float32) * 0.05
    return dict(bb_w=bb_w, bb_b=bb_b, cls_w=cls_w, cls_b=cls_b)


def simple_segmentation_forward(bd, params, n_classes, compute_dtype=jnp.bfloat16):
    x = bd['mag_X']                                  # (N, C, H, W): complex_numbers=False
    N, C, H, W = x.shape
    cdt = compute_dtype

    # backbone conv3x3 s2 p1 (+ReLU) fused with the 1x1 classifier: one pallas_call,
    # logits produced directly in (N, n_classes, Hf*Wf) == NCHW order.
    patches, Hf, Wf = _im2col(x, 3, 3, 2, 1)
    logits = fused_conv_classifier(
        patches.astype(cdt),
        params['bb_w'].astype(cdt),
        params['bb_b'].reshape(1, -1).astype(jnp.float32),
        params['cls_w'].T.astype(cdt),
        params['cls_b'].reshape(-1, 1).astype(jnp.float32),
        n_images=N, spatial=Hf * Wf, out_dtype=cdt)

    # F.interpolate(bilinear, align_corners=False, size=(H, W)) fused with tanh.
    wh = _bilinear_matrix(H, Hf).astype(cdt)         # (Hout, Hin)
    wwT = _bilinear_matrix(W, Wf).T.astype(cdt)      # (Win, Wout)
    mask = bilinear_tanh(logits.reshape(N * n_classes, Hf, Wf), wh, wwT,
                         out_dtype=x.dtype)
    mask = mask.reshape(N, n_classes, H, W)

    out = dict(bd)
    out['M_hat'] = mask
    return out


def _reference_forward(bd, params):
    """Pure-jnp f32 reference of the same math (validates the Pallas kernels)."""
    x = bd['mag_X']
    N, C, H, W = x.shape
    n_classes = params['cls_w'].shape[1]
    patches, Hf, Wf = _im2col(x, 3, 3, 2, 1)
    feat = jnp.maximum(patches @ params['bb_w'] + params['bb_b'], 0.0)
    logits = (feat @ params['cls_w'] + params['cls_b']).reshape(N, Hf, Wf, n_classes)
    logits = logits.transpose(0, 3, 1, 2)
    wh = _bilinear_matrix(H, Hf)
    ww = _bilinear_matrix(W, Wf)
    up = jnp.einsum('oh,nchw,pw->ncop', wh, logits, ww)
    return jnp.tanh(up)


if __name__ == "__main__":
    key = jax.random.PRNGKey(0)
    k_x, k_p = jax.random.split(key)

    # Spectrogram-like demo shape; W=128 keeps the upsampled minor dim lane-dense (128),
    # and N*n_classes=16 / N=2 give >=2 "parallel" programs per kernel (v7x megacore).
    N, C_IN, H, W = 2, 4, 16, 128
    C_FEAT, N_CLASSES = 16, 8

    x = jax.random.normal(k_x, (N, C_IN, H, W), jnp.float32)
    bd = {'mag_X': x}
    params = init_params(k_p, C_IN, C_FEAT, N_CLASSES)

    ref = jax.block_until_ready(_reference_forward(bd, params))

    # Performance configuration: bf16 MXU operands, f32 accumulation.
    result = simple_segmentation_forward(bd, params, N_CLASSES, compute_dtype=jnp.bfloat16)
    mask = jax.block_until_ready(result['M_hat'])
    assert mask.shape == (N, N_CLASSES, H, W), mask.shape
    assert mask.dtype == jnp.float32, mask.dtype
    assert jnp.allclose(mask, ref, atol=5e-2, rtol=0.0), \
        float(jnp.max(jnp.abs(mask - ref)))

    # Exactness check: identical kernels fed f32.
    result32 = simple_segmentation_forward(bd, params, N_CLASSES, compute_dtype=jnp.float32)
    mask32 = jax.block_until_ready(result32['M_hat'])
    assert jnp.allclose(mask32, ref, atol=1e-4, rtol=1e-4), \
        float(jnp.max(jnp.abs(mask32 - ref)))

    print("KERNEL_OK")
</pallas_src>

<mosaic_0001>
module attributes {stable_mosaic.version = 11 : i64} {
  func.func @_fused_conv_classifier_kernel(%arg0: i32, %arg1: i32, %arg2: memref<256x36xbf16, #tpu.memory_space<vmem>>, %arg3: memref<36x16xbf16, #tpu.memory_space<vmem>>, %arg4: memref<1x16xf32, #tpu.memory_space<vmem>>, %arg5: memref<8x16xbf16, #tpu.memory_space<vmem>>, %arg6: memref<8x1xf32, #tpu.memory_space<vmem>>, %arg7: memref<1x8x256xbf16, #tpu.memory_space<vmem>>) attributes {dimension_semantics = [#tpu.dimension_semantics<parallel>, #tpu.dimension_semantics<parallel>], iteration_bounds = array<i64: 2, 2>, scalar_prefetch = 0 : i64, scratch_operands = 0 : i64, tpu.core_type = #tpu.core_type<tc>, window_params = [{transform_indices = @transform_0, window_bounds = array<i64: 256, 36>}, {pipeline_mode = #tpu.pipeline_mode<synchronous>, transform_indices = @transform_1, window_bounds = array<i64: 36, 16>}, {pipeline_mode = #tpu.pipeline_mode<synchronous>, transform_indices = @transform_2, window_bounds = array<i64: 1, 16>}, {pipeline_mode = #tpu.pipeline_mode<synchronous>, transform_indices = @transform_3, window_bounds = array<i64: 8, 16>}, {pipeline_mode = #tpu.pipeline_mode<synchronous>, transform_indices = @transform_4, window_bounds = array<i64: 8, 1>}, {transform_indices = @transform_5, window_bounds = array<i64: 1, 8, 256>}]} {
    %c0 = arith.constant 0 : index
    %c0_0 = arith.constant 0 : index
    %0 = vector.load %arg2[%c0, %c0_0] : memref<256x36xbf16, #tpu.memory_space<vmem>>, vector<256x36xbf16>
    %c0_1 = arith.constant 0 : index
    %c0_2 = arith.constant 0 : index
    %1 = vector.load %arg3[%c0_1, %c0_2] : memref<36x16xbf16, #tpu.memory_space<vmem>>, vector<36x16xbf16>
    %cst = arith.constant dense<0.000000e+00> : vector<256x16xf32>
    %2 = tpu.matmul %0, %1, %cst {dimension_numbers = #tpu.dot_dimension_numbers<[1], [0], [0], [1], [0, 0, 1, 1], [], []>} : vector<256x36xbf16>, vector<36x16xbf16>, vector<256x16xf32> -> vector<256x16xf32>
    %c0_3 = arith.constant 0 : index
    %c0_4 = arith.constant 0 : index
    %3 = vector.load %arg4[%c0_3, %c0_4] : memref<1x16xf32, #tpu.memory_space<vmem>>, vector<1x16xf32>
    %4 = vector.broadcast %3 : vector<1x16xf32> to vector<256x16xf32>
    %5 = arith.addf %2, %4 : vector<256x16xf32>
    %cst_5 = arith.constant 0.000000e+00 : f32
    %6 = vector.broadcast %cst_5 : f32 to vector<256x16xf32>
    %7 = arith.maximumf %5, %6 : vector<256x16xf32>
    %8 = arith.truncf %7 : vector<256x16xf32> to vector<256x16xbf16>
    %c0_6 = arith.constant 0 : index
    %c0_7 = arith.constant 0 : index
    %9 = vector.load %arg5[%c0_6, %c0_7] : memref<8x16xbf16, #tpu.memory_space<vmem>>, vector<8x16xbf16>
    %cst_8 = arith.constant dense<0.000000e+00> : vector<8x256xf32>
    %10 = tpu.matmul %9, %8, %cst_8 {dimension_numbers = #tpu.dot_dimension_numbers<[1], [1], [0], [0], [0, 0, 1, 0], [], []>} : vector<8x16xbf16>, vector<256x16xbf16>, vector<8x256xf32> -> vector<8x256xf32>
    %c0_9 = arith.constant 0 : index
    %c0_10 = arith.constant 0 : index
    %11 = vector.load %arg6[%c0_9, %c0_10] : memref<8x1xf32, #tpu.memory_space<vmem>>, vector<8x1xf32>
    %12 = vector.broadcast %11 : vector<8x1xf32> to vector<8x256xf32>
    %13 = arith.addf %10, %12 : vector<8x256xf32>
    %14 = arith.truncf %13 : vector<8x256xf32> to vector<8x256xbf16>
    %c0_11 = arith.constant 0 : index
    %c0_12 = arith.constant 0 : index
    %c0_13 = arith.constant 0 : index
    %15 = vector.load %arg7[%c0_11, %c0_12, %c0_13] : memref<1x8x256xbf16, #tpu.memory_space<vmem>>, vector<1x8x256xbf16>
    %16 = vector.shape_cast %15 : vector<1x8x256xbf16> to vector<8x256xbf16>
    %17 = vector.shape_cast %14 : vector<8x256xbf16> to vector<1x8x256xbf16>
    tpu.vector_store %arg7[%c0_11, %c0_12, %c0_13], %17 {strides = array<i32>} : memref<1x8x256xbf16, #tpu.memory_space<vmem>>, vector<1x8x256xbf16>,
    return
  }
  func.func @transform_0(%arg0: i32, %arg1: i32) -> (i32, i32) {
    %c2_i32 = arith.constant 2 : i32
    %0 = arith.muli %arg0, %c2_i32 : i32
    %1 = arith.addi %0, %arg1 : i32
    %c0_i32 = arith.constant 0 : i32
    %c0_i32_0 = arith.constant 0 : i32
    return %1, %c0_i32 : i32, i32
  }
  func.func @transform_1(%arg0: i32, %arg1: i32) -> (i32, i32) {
    %c0_i32 = arith.constant 0 : i32
    %c0_i32_0 = arith.constant 0 : i32
    %c0_i32_1 = arith.constant 0 : i32
    return %c0_i32, %c0_i32_0 : i32, i32
  }
  func.func @transform_2(%arg0: i32, %arg1: i32) -> (i32, i32) {
    %c0_i32 = arith.constant 0 : i32
    %c0_i32_0 = arith.constant 0 : i32
    %c0_i32_1 = arith.constant 0 : i32
    return %c0_i32, %c0_i32_0 : i32, i32
  }
  func.func @transform_3(%arg0: i32, %arg1: i32) -> (i32, i32) {
    %c0_i32 = arith.constant 0 : i32
    %c0_i32_0 = arith.constant 0 : i32
    %c0_i32_1 = arith.constant 0 : i32
    return %c0_i32, %c0_i32_0 : i32, i32
  }
  func.func @transform_4(%arg0: i32, %arg1: i32) -> (i32, i32) {
    %c0_i32 = arith.constant 0 : i32
    %c0_i32_0 = arith.constant 0 : i32
    %c0_i32_1 = arith.constant 0 : i32
    return %c0_i32, %c0_i32_0 : i32, i32
  }
  func.func @transform_5(%arg0: i32, %arg1: i32) -> (i32, i32, i32) {
    %c0_i32 = arith.constant 0 : i32
    %c0_i32_0 = arith.constant 0 : i32
    return %arg0, %c0_i32, %arg1 : i32, i32, i32
  }
}

</mosaic_0001>

<llo_original>
// kernel: tpu_custom_call.1
$region0: #{tpu_custom_call.1}
  #allocation0 [shape = 'u32[]', space=smem, size = 0x4, offset = 0x4, fixed_abs, tag = 'smem constant byte address 0x4 - core index']
  #allocation1 [shape = 'u32[144,128]{1,0:T(1,128)}', space=vmem, size = 0x12000, scoped, tag = 'internal scratch']
  %s0 = inlined_call_operand.vmem [shape: bf16[1024,36], index: 0, kind: input, shape index: {}]
  %s1 = inlined_call_operand.vmem [shape: bf16[36,16], index: 1, kind: input, shape index: {}]
  %s2 = inlined_call_operand.vmem [shape: f32[1,16], index: 2, kind: input, shape index: {}]
  %s3 = inlined_call_operand.vmem [shape: bf16[8,16], index: 3, kind: input, shape index: {}]
  %s4 = inlined_call_operand.vmem [shape: f32[8,1], index: 4, kind: input, shape index: {}]
  %s5 = inlined_call_operand.hbm [shape: bf16[2,8,512], index: 5, kind: output, shape index: {}]
  %s6 = sld [smem:[#allocation0]]
  $region53: #{tpu_custom_call.1} parent=0
    _
  %s8 = ssub.s32 1, %s6
  %s9 = scalar_select 0, %s8, %s6
  $region1: #{tpu_custom_call.1} parent=0
    #allocation2 [shape = 'u8[8192]{0}', space=vmem, size = 0x2000, scoped, tag = 'output window, operand 0']
    #allocation3 [shape = 's32[2]{0}', space=sflag, size = 0x8, scoped, tag = 'scoped memory for tpu_custom_call.1']
    %10 = vsyncpa [#allocation3], 0
    %s11 = scalar_lea.sflag [#allocation3], 1
    %12 = vsyncpa %s11, 0
    loop: start=0, step=1, limit=6
    $region2: #{tpu_custom_call.1} parent=1 // loop_pre_header
      _
    $region3: #{tpu_custom_call.1} parent=1 // loop_header
      %s14 = sphi 0, %s18
      %p15 = scmp.ge.s32.totalorder %s14, 6
      %s21 = sphi 0, %s33
      %s22 = sphi 0, %s29
      %s23 = sphi 0, %s21
      %s24 = sphi 0, %s22
      %s25 = sphi 0, %s23
      %s26 = sphi 0, %s24
      %s40 = sphi 0, %s42
      %s43 = sphi 0, %s40
      %s44 = sphi 0, %s43
      %s60 = sphi 0, %s44
      %s64 = sphi 0, %s64
      %s66 = sphi 0, %s64
      %s67 = sphi 0, %s66
      %s81 = sphi 0, %s67
      %s85 = sphi 0, %s85
      %s87 = sphi 0, %s85
      %s88 = sphi 0, %s87
      %s102 = sphi 0, %s88
      %s106 = sphi 0, %s106
      %s108 = sphi 0, %s106
      %s109 = sphi 0, %s108
      %s123 = sphi 0, %s109
      %s127 = sphi 0, %s127
      %s129 = sphi 0, %s127
      %s130 = sphi 0, %s129
      %s144 = sphi 0, %s130
      %s152 = sphi 0, %s154
      %s155 = sphi 0, %s152
      %s156 = sphi 0, %s155
      %s172 = sphi 0, %s156
    $region4: #{tpu_custom_call.1} parent=1 // loop_header_branch
      %17 = sbr.rel (%p15) target = $region8
    $region5: #{tpu_custom_call.1} parent=1 // loop_body
      %s19 = ssub.s32 %s14, 1
      %s20 = ssub.s32 %s14, 2
      %s27 = sadd.s32 1, %s22
      %p28 = scmp.ge.s32.totalorder %s27, 2
      %s29 = scalar_select %p28, 0, %s27
      %s30 = sadd.s32 1, %s21
      %s31 = scalar_select %p28, %s30, %s21
      %p32 = scmp.ge.s32.totalorder %s31, 2
      %s33 = scalar_select %p32, 0, %s31
      %s34 = smul.u32 %s21, 2
      %s35 = sadd.s32 %s34, %s22
      %s36 = smul.u32 %s33, 2
      %s37 = sadd.s32 %s36, %s29
      %s38 = ssub.s32 %s35, %s37
      %p39 = scmp.eq.s32.totalorder %s38, 0
      %s41 = sadd.s32 %s40, 1
      %s42 = scalar_select %p39, %s40, %s41
      %p45 = pneg %p39
      %p46 = scmp.eq.s32.totalorder %s14, 3
      %p47 = por %p45, %p46
      %p48 = scmp.ne.s32.totalorder %s40, %s43
      %p49 = scmp.eq.s32.totalorder %s14, 0
      %p50 = por %p48, %p49
      %p51 = scmp.ne.s32.totalorder %s40, %s43
      %p52 = scmp.eq.s32.totalorder %s19, 3
      %p53 = por %p51, %p52
      %p54 = scmp.ne.s32.totalorder %s43, %s44
      %p55 = scmp.eq.s32.totalorder %s19, 0
      %p56 = por %p54, %p55
      %p57 = scmp.ne.s32.totalorder %s43, %s44
      %p58 = scmp.eq.s32.totalorder %s20, 3
      %p59 = por %p57, %p58
      %p61 = scmp.ne.s32.totalorder %s44, %s60
      %p62 = scmp.eq.s32.totalorder %s20, 0
      %p63 = por %p61, %p62
      %s65 = sadd.s32 %s64, 1
      %p68 = scmp.eq.s32.totalorder %s14, 3
      %p69 = scmp.ne.s32.totalorder %s64, %s66
      %p70 = scmp.eq.s32.totalorder %s14, 0
      %p71 = por %p69, %p70
      %p72 = scmp.ne.s32.totalorder %s64, %s66
      %p73 = scmp.eq.s32.totalorder %s19, 3
      %p74 = por %p72, %p73
      %p75 = scmp.ne.s32.totalorder %s66, %s67
      %p76 = scmp.eq.s32.totalorder %s19, 0
      %p77 = por %p75, %p76
      %p78 = scmp.ne.s32.totalorder %s66, %s67
      %p79 = scmp.eq.s32.totalorder %s20, 3
      %p80 = por %p78, %p79
      %p82 = scmp.ne.s32.totalorder %s67, %s81
      %p83 = scmp.eq.s32.totalorder %s20, 0
      %p84 = por %p82, %p83
      %s86 = sadd.s32 %s85, 1
      %p89 = scmp.eq.s32.totalorder %s14, 3
      %p90 = scmp.ne.s32.totalorder %s85, %s87
      %p91 = scmp.eq.s32.totalorder %s14, 0
      %p92 = por %p90, %p91
      %p93 = scmp.ne.s32.totalorder %s85, %s87
      %p94 = scmp.eq.s32.totalorder %s19, 3
      %p95 = por %p93, %p94
      %p96 = scmp.ne.s32.totalorder %s87, %s88
      %p97 = scmp.eq.s32.totalorder %s19, 0
      %p98 = por %p96, %p97
      %p99 = scmp.ne.s32.totalorder %s87, %s88
      %p100 = scmp.eq.s32.totalorder %s20, 3
      %p101 = por %p99, %p100
      %p103 = scmp.ne.s32.totalorder %s88, %s102
      %p104 = scmp.eq.s32.totalorder %s20, 0
      %p105 = por %p103, %p104
      %s107 = sadd.s32 %s106, 1
      %p110 = scmp.eq.s32.totalorder %s14, 3
      %p111 = scmp.ne.s32.totalorder %s106, %s108
      %p112 = scmp.eq.s32.totalorder %s14, 0
      %p113 = por %p111, %p112
      %p114 = scmp.ne.s32.totalorder %s106, %s108
      %p115 = scmp.eq.s32.totalorder %s19, 3
      %p116 = por %p114, %p115
      %p117 = scmp.ne.s32.totalorder %s108, %s109
      %p118 = scmp.eq.s32.totalorder %s19, 0
      %p119 = por %p117, %p118
      %p120 = scmp.ne.s32.totalorder %s108, %s109
      %p121 = scmp.eq.s32.totalorder %s20, 3
      %p122 = por %p120, %p121
      %p124 = scmp.ne.s32.totalorder %s109, %s123
      %p125 = scmp.eq.s32.totalorder %s20, 0
      %p126 = por %p124, %p125
      %s128 = sadd.s32 %s127, 1
      %p131 = scmp.eq.s32.totalorder %s14, 3
      %p132 = scmp.ne.s32.totalorder %s127, %s129
      %p133 = scmp.eq.s32.totalorder %s14, 0
      %p134 = por %p132, %p133
      %p135 = scmp.ne.s32.totalorder %s127, %s129
      %p136 = scmp.eq.s32.totalorder %s19, 3
      %p137 = por %p135, %p136
      %p138 = scmp.ne.s32.totalorder %s129, %s130
      %p139 = scmp.eq.s32.totalorder %s19, 0
      %p140 = por %p138, %p139
      %p141 = scmp.ne.s32.totalorder %s129, %s130
      %p142 = scmp.eq.s32.totalorder %s20, 3
      %p143 = por %p141, %p142
      %p145 = scmp.ne.s32.totalorder %s130, %s144
      %p146 = scmp.eq.s32.totalorder %s20, 0
      %p147 = por %p145, %p146
      %s148 = ssub.s32 %s21, %s33
      %s149 = ssub.s32 %s22, %s29
      %s150 = sor.u32 %s148, %s149
      %p151 = scmp.eq.s32.totalorder %s150, 0
      %s153 = sadd.s32 %s152, 1
      %s154 = scalar_select %p151, %s152, %s153
      %p157 = pneg %p151
      %p158 = scmp.eq.s32.totalorder %s14, 3
      %p159 = por %p157, %p158
      %p160 = scmp.ne.s32.totalorder %s152, %s155
      %p161 = scmp.eq.s32.totalorder %s14, 0
      %p162 = por %p160, %p161
      %p163 = scmp.ne.s32.totalorder %s152, %s155
      %p164 = scmp.eq.s32.totalorder %s19, 3
      %p165 = por %p163, %p164
      %p166 = scmp.ne.s32.totalorder %s155, %s156
      %p167 = scmp.eq.s32.totalorder %s19, 0
      %p168 = por %p166, %p167
      %p169 = scmp.ne.s32.totalorder %s155, %s156
      %p170 = scmp.eq.s32.totalorder %s20, 3
      %p171 = por %p169, %p170
      %p173 = scmp.ne.s32.totalorder %s156, %s172
      %p174 = scmp.eq.s32.totalorder %s20, 0
      %p175 = por %p173, %p174
      %p176 = scmp.le.s32.totalorder 1, %s14
      %p177 = scmp.lt.s32.totalorder %s14, 5
      %p178 = pnand %p176, %p177
      %p179 = pneg %p178
      // Predicated region
      $region9: #{tpu_custom_call.1} parent=5 // pred_check
        _
      $region10: #{tpu_custom_call.1} parent=5 // pred_check_branch
        %181 = sbr.rel (%p178) target = $region12
      $region11: #{tpu_custom_call.1} parent=5 // pred_region
        %s182 = ssub.s32 %s14, 1
        // Predicated region
        $region13: #{tpu_custom_call.1} parent=11 // pred_check
          %p183 = pneg %p77
        $region14: #{tpu_custom_call.1} parent=11 // pred_check_branch
          %185 = sbr.rel (%p183) target = $region16
        $region15: #{tpu_custom_call.1} parent=11 // pred_region
          _
        $region16: #{tpu_custom_call.1} parent=11 // pred_fallthru
          _
        // Predicated region
        $region17: #{tpu_custom_call.1} parent=11 // pred_check
          %p186 = pneg %p98
        $region18: #{tpu_custom_call.1} parent=11 // pred_check_branch
          %188 = sbr.rel (%p186) target = $region20
        $region19: #{tpu_custom_call.1} parent=11 // pred_region
          _
        $region20: #{tpu_custom_call.1} parent=11 // pred_fallthru
          _
        // Predicated region
        $region21: #{tpu_custom_call.1} parent=11 // pred_check
          %p189 = pneg %p119
        $region22: #{tpu_custom_call.1} parent=11 // pred_check_branch
          %191 = sbr.rel (%p189) target = $region24
        $region23: #{tpu_custom_call.1} parent=11 // pred_region
          _
        $region24: #{tpu_custom_call.1} parent=11 // pred_fallthru
          _
        // Predicated region
        $region25: #{tpu_custom_call.1} parent=11 // pred_check
          %p192 = pneg %p140
        $region26: #{tpu_custom_call.1} parent=11 // pred_check_branch
          %194 = sbr.rel (%p192) target = $region28
        $region27: #{tpu_custom_call.1} parent=11 // pred_region
          _
        $region28: #{tpu_custom_call.1} parent=11 // pred_fallthru
          _
      $region12: #{tpu_custom_call.1} parent=5 // pred_fallthru
        _
      %p195 = scmp.lt.s32.totalorder %s14, 4
      // Predicated region
      $region29: #{tpu_custom_call.1} parent=5 // pred_check
        %p196 = pneg %p195
      $region30: #{tpu_custom_call.1} parent=5 // pred_check_branch
        %198 = sbr.rel (%p196) target = $region32
      $region31: #{tpu_custom_call.1} parent=5 // pred_region
        // Predicated region
        $region33: #{tpu_custom_call.1} parent=31 // pred_check
          %p199 = pneg %p50
        $region34: #{tpu_custom_call.1} parent=31 // pred_check_branch
          %201 = sbr.rel (%p199) target = $region36
        $region35: #{tpu_custom_call.1} parent=31 // pred_region
          %s202 = smul.u32 %s21, 2
          %s203 = sadd.s32 %s202, %s22
          %s204 = smul.u32 32, %s203
          %p205 = scmp.lt.s32.totalorder %s204, 127
          %s206 = scalar_select %p205, %s204, 127
          %s207 = smul.addr %s206, 4
          %s208 = scalar_lea.vmem %s0, %s207
          %s209 = smul.u32 %s21, 2
          %s210 = sadd.s32 %s209, %s22
          %s211 = smul.u32 32, %s210
        $region36: #{tpu_custom_call.1} parent=31 // pred_fallthru
          _
      $region32: #{tpu_custom_call.1} parent=5 // pred_fallthru
        _
      %p212 = scmp.le.s32.totalorder 1, %s14
      %p213 = scmp.lt.s32.totalorder %s14, 5
      %p214 = pnand %p212, %p213
      %p215 = pneg %p214
      // Predicated region
      $region37: #{tpu_custom_call.1} parent=5 // pred_check
        _
      $region38: #{tpu_custom_call.1} parent=5 // pred_check_branch
        %217 = sbr.rel (%p214) target = $region40
      $region39: #{tpu_custom_call.1} parent=5 // pred_region
        %s218 = ssub.s32 %s14, 1
        %s219 = smul.u32 %s23, 2
        %s220 = sadd.s32 %s219, %s24
        %s221 = smul.u32 32, %s220
        %p222 = scmp.lt.s32.totalorder %s221, 127
        %s223 = scalar_select %p222, %s221, 127
        %s224 = smul.addr %s223, 4
        %s225 = scalar_lea.vmem %s0, %s224
        %p226 = pneg %p56
        %p227 = pneg %p53
        %p228 = pneg %p77
        %p229 = pneg %p74
        %p230 = pneg %p98
        %p231 = pneg %p95
        %p232 = pneg %p119
        %p233 = pneg %p116
        %p234 = pneg %p140
        %p235 = pneg %p137
        %p236 = pneg %p168
        %p237 = pneg %p165
        %s238 = sand.u32 %s155, 1
        %s239 = scalar_lea.sflag [#allocation3], %s238
        %s240 = sand.u32 %s155, 1
        %s241 = smul.addr %s240, 8
        %s242 = scalar_lea.vmem [#allocation2], %s241
        %s243 = smul.u32 %s23, 2
        %s244 = sadd.s32 %s243, %s24
        %s245 = smul.u32 32, %s244
        %p246 = scmp.lt.s32.totalorder %s245, 127
        %s247 = scalar_select %p246, %s245, 127
        %s248 = smul.addr %s247, 4
        %s249 = scalar_lea.vmem %s0, %s248
        %s250 = smul.u32 %s23, 2
        %s251 = sadd.s32 %s250, %s24
        %s252 = smul.u32 32, %s251
        %s253 = smul.u32 2, %s24
        %v255 = vld [vmem:[%s249] sm:$0xf]
        %v256 = vld [vmem:[%s249 + $0x4] sm:$0xf]
        %v257 = vld [vmem:[%s249 + $0x8] sm:$0xf]
        %v258 = vld [vmem:[%s249 + $0xc] sm:$0xf]
        %v259 = vld [vmem:[%s249 + $0x10] sm:$0xf]
        %v260 = vld [vmem:[%s249 + $0x14] sm:$0xf]
        %v261 = vld [vmem:[%s249 + $0x18] sm:$0xf]
        %v262 = vld [vmem:[%s249 + $0x1c] sm:$0xf]
        %v263 = vld [vmem:[%s249 + $0x20] sm:$0xf]
        %v264 = vld [vmem:[%s249 + $0x24] sm:$0xf]
        %v265 = vld [vmem:[%s249 + $0x28] sm:$0xf]
        %v266 = vld [vmem:[%s249 + $0x2c] sm:$0xf]
        %v267 = vld [vmem:[%s249 + $0x30] sm:$0xf]
        %v268 = vld [vmem:[%s249 + $0x34] sm:$0xf]
        %v269 = vld [vmem:[%s249 + $0x38] sm:$0xf]
        %v270 = vld [vmem:[%s249 + $0x3c] sm:$0xf]
        %v271 = vld [vmem:[%s249 + $0x40] sm:$0xf]
        %v272 = vld [vmem:[%s249 + $0x44] sm:$0xf]
        %v273 = vld [vmem:[%s249 + $0x48] sm:$0xf]
        %v274 = vld [vmem:[%s249 + $0x4c] sm:$0xf]
        %v275 = vld [vmem:[%s249 + $0x50] sm:$0xf]
        %v276 = vld [vmem:[%s249 + $0x54] sm:$0xf]
        %v277 = vld [vmem:[%s249 + $0x58] sm:$0xf]
        %v278 = vld [vmem:[%s249 + $0x5c] sm:$0xf]
        %v279 = vld [vmem:[%s249 + $0x60] sm:$0xf]
        %v280 = vld [vmem:[%s249 + $0x64] sm:$0xf]
        %v281 = vld [vmem:[%s249 + $0x68] sm:$0xf]
        %v282 = vld [vmem:[%s249 + $0x6c] sm:$0xf]
        %v283 = vld [vmem:[%s249 + $0x70] sm:$0xf]
        %v284 = vld [vmem:[%s249 + $0x74] sm:$0xf]
        %v285 = vld [vmem:[%s249 + $0x78] sm:$0xf]
        %v286 = vld [vmem:[%s249 + $0x7c] sm:$0xf]
        %v287 = vld [vmem:[%s1] sm:$0xf]
        %v288 = vld [vmem:[%s1 + $0x4] sm:$0xf]
        %v289 = vld [vmem:[%s1 + $0x8] sm:$0xf]
        %v290 = vld [vmem:[%s1 + $0xc] sm:$0xf]
        %v291 = vld [vmem:[%s1 + $0x10] sm:$0x3]
        %v292 = vld [vmem:[%s2] sm:$0x1]
        %v294 = vlaneseq
        %v295 = vshrl.u32 %v294, 7
        %v296 = vsub.s32 0, %v295
        %v297 = vrot.slane %v292, %v296
        %v331 = vunpack.c.l.b16 %v255
        %v332 = vunpack.c.l.b16 %v256
        %v333 = vunpack.c.l.b16 %v257
        %v334 = vunpack.c.l.b16 %v258
        %v335 = vunpack.c.l.b16 %v259
        %v336 = vunpack.c.l.b16 %v260
        %v337 = vunpack.c.l.b16 %v261
        %v338 = vunpack.c.l.b16 %v262
        %v339 = vunpack.c.l.b16 %v263
        %v340 = vunpack.c.l.b16 %v264
        %v341 = vunpack.c.l.b16 %v265
        %v342 = vunpack.c.l.b16 %v266
        %v343 = vunpack.c.l.b16 %v267
        %v344 = vunpack.c.l.b16 %v268
        %v345 = vunpack.c.l.b16 %v269
        %v346 = vunpack.c.l.b16 %v270
        %v347 = vunpack.c.l.b16 %v271
        %v348 = vunpack.c.l.b16 %v272
        %v349 = vunpack.c.l.b16 %v273
        %v350 = vunpack.c.l.b16 %v274
        %v351 = vunpack.c.l.b16 %v275
        %v352 = vunpack.c.l.b16 %v276
        %v353 = vunpack.c.l.b16 %v277
        %v354 = vunpack.c.l.b16 %v278
        %v355 = vunpack.c.l.b16 %v279
        %v356 = vunpack.c.l.b16 %v280
        %v357 = vunpack.c.l.b16 %v281
        %v358 = vunpack.c.l.b16 %v282
        %v359 = vunpack.c.l.b16 %v283
        %v360 = vunpack.c.l.b16 %v284
        %v361 = vunpack.c.l.b16 %v285
        %v362 = vunpack.c.l.b16 %v286
        %v363 = vpack.c.b16 %v332, %v331
        %v364 = vpack.c.b16 %v334, %v333
        %v365 = vpack.c.b16 %v336, %v335
        %v366 = vpack.c.b16 %v338, %v337
        %v367 = vpack.c.b16 %v340, %v339
        %v368 = vpack.c.b16 %v342, %v341
        %v369 = vpack.c.b16 %v344, %v343
        %v370 = vpack.c.b16 %v346, %v345
        %v371 = vpack.c.b16 %v348, %v347
        %v372 = vpack.c.b16 %v350, %v349
        %v373 = vpack.c.b16 %v352, %v351
        %v374 = vpack.c.b16 %v354, %v353
        %v375 = vpack.c.b16 %v356, %v355
        %v376 = vpack.c.b16 %v358, %v357
        %v377 = vpack.c.b16 %v360, %v359
        %v378 = vpack.c.b16 %v362, %v361
        %v384 = vunpack.c.l.b16 %v287
        %v385 = vunpack.c.l.b16 %v288
        %v386 = vunpack.c.l.b16 %v289
        %v387 = vunpack.c.l.b16 %v290
        %v388 = vunpack.c.l.b16 %v291
        %v389 = vpack.c.b16 %v385, %v384
        %v390 = vpack.c.b16 %v387, %v386
        %v391 = vpack.c.b16 %v388, %v388
        %vm394 = vcmask 293888
        %v396 = vsel %vm394, %v363, 0
        %v399 = vsel %vm394, %v364, 0
        %v402 = vsel %vm394, %v365, 0
        %v405 = vsel %vm394, %v366, 0
        %v408 = vsel %vm394, %v367, 0
        %v411 = vsel %vm394, %v368, 0
        %v414 = vsel %vm394, %v369, 0
        %v417 = vsel %vm394, %v370, 0
        %v420 = vsel %vm394, %v371, 0
        %v423 = vsel %vm394, %v372, 0
        %v426 = vsel %vm394, %v373, 0
        %v429 = vsel %vm394, %v374, 0
        %v432 = vsel %vm394, %v375, 0
        %v435 = vsel %vm394, %v376, 0
        %v438 = vsel %vm394, %v377, 0
        %v441 = vsel %vm394, %v378, 0
        %vm443 = vcmask 1041408
        %v445 = vsel %vm443, %v391, 0
        %447 = vmatprep.subr.bf16.mxu0 0
        %448 = vmatpush1.bf16.msra.mxu0 %v389
        %449 = vmatprep.subr.bf16.mxu0 0
        %450 = vmatpush1.bf16.msra.mxu0 %v390
        %451 = vmatprep.subr.bf16.mxu0 0
        %452 = vmatpush1.bf16.msra.mxu0 %v445
        %453 = vmatprep.subr.bf16.mxu0 0
        %454 = vmatpush1.bf16.msra.mxu0 0
        %455 = vmatprep.subr.bf16.mxu0 0
        %456 = vmatpush1.bf16.msra.mxu0 0
        %457 = vmatprep.subr.bf16.mxu0 0
        %458 = vmatpush1.bf16.msra.mxu0 0
        %459 = vmatprep.subr.bf16.mxu0 0
        %460 = vmatpush1.bf16.msra.mxu0 0
        %461 = vmatprep.subr.bf16.mxu0 0
        %462 = vmatpush1.bf16.msra.mxu0 0
        %463 = vmatprep.subr.bf16.mxu0 0
        %464 = vmatpush1.bf16.msra.mxu0 0
        %465 = vmatprep.subr.bf16.mxu0 0
        %466 = vmatpush1.bf16.msra.mxu0 0
        %467 = vmatprep.subr.bf16.mxu0 0
        %468 = vmatpush1.bf16.msra.mxu0 0
        %469 = vmatprep.subr.bf16.mxu0 0
        %470 = vmatpush1.bf16.msra.mxu0 0
        %471 = vmatprep.subr.bf16.mxu0 0
        %472 = vmatpush1.bf16.msra.mxu0 0
        %473 = vmatprep.subr.bf16.mxu0 0
        %474 = vmatpush1.bf16.msra.mxu0 0
        %475 = vmatprep.subr.bf16.mxu0 0
        %476 = vmatpush1.bf16.msra.mxu0 0
        %477 = vmatprep.subr.bf16.mxu0 0
        %478 = vmatpush1.bf16.msra.mxu0 0
        %479 = vmatprep.mubr.bf16.mxu0 0
        %480 = vmatmul.mubr.bf16.gmra.mrb[0].mxu0 %v396
        %v481 = vpop.f32.mrb[0].mxu0
        %v482 = vadd.f32 %v297, %v481
        %v483 = vpop.f32.mrb[0].mxu0
        %v484 = vpop.f32.mrb[0].mxu0
        %v485 = vadd.f32 %v297, %v484
        %v486 = vpop.f32.mrb[0].mxu0
        %487 = vmatprep.mubr.bf16.mxu0 0
        %488 = vmatmul.mubr.bf16.gmra.mrb[0].mxu0 %v399
        %v489 = vpop.f32.mrb[0].mxu0
        %v490 = vadd.f32 %v297, %v489
        %v491 = vpop.f32.mrb[0].mxu0
        %v492 = vpop.f32.mrb[0].mxu0
        %v493 = vadd.f32 %v297, %v492
        %v494 = vpop.f32.mrb[0].mxu0
        %495 = vmatprep.mubr.bf16.mxu0 0
        %496 = vmatmul.mubr.bf16.gmra.mrb[0].mxu0 %v402
        %v497 = vpop.f32.mrb[0].mxu0
        %v498 = vadd.f32 %v297, %v497
        %v499 = vpop.f32.mrb[0].mxu0
        %v500 = vpop.f32.mrb[0].mxu0
        %v501 = vadd.f32 %v297, %v500
        %v502 = vpop.f32.mrb[0].mxu0
        %503 = vmatprep.mubr.bf16.mxu0 0
        %504 = vmatmul.mubr.bf16.gmra.mrb[0].mxu0 %v405
        %v505 = vpop.f32.mrb[0].mxu0
        %v506 = vadd.f32 %v297, %v505
        %v507 = vpop.f32.mrb[0].mxu0
        %v508 = vpop.f32.mrb[0].mxu0
        %v509 = vadd.f32 %v297, %v508
        %v510 = vpop.f32.mrb[0].mxu0
        %511 = vmatprep.mubr.bf16.mxu0 0
        %512 = vmatmul.mubr.bf16.gmra.mrb[0].mxu0 %v408
        %v513 = vpop.f32.mrb[0].mxu0
        %v514 = vadd.f32 %v297, %v513
        %v515 = vpop.f32.mrb[0].mxu0
        %v516 = vpop.f32.mrb[0].mxu0
        %v517 = vadd.f32 %v297, %v516
        %v518 = vpop.f32.mrb[0].mxu0
        %519 = vmatprep.mubr.bf16.mxu0 0
        %520 = vmatmul.mubr.bf16.gmra.mrb[0].mxu0 %v411
        %v521 = vpop.f32.mrb[0].mxu0
        %v522 = vadd.f32 %v297, %v521
        %v523 = vpop.f32.mrb[0].mxu0
        %v524 = vpop.f32.mrb[0].mxu0
        %v525 = vadd.f32 %v297, %v524
        %v526 = vpop.f32.mrb[0].mxu0
        %527 = vmatprep.mubr.bf16.mxu0 0
        %528 = vmatmul.mubr.bf16.gmra.mrb[0].mxu0 %v414
        %v529 = vpop.f32.mrb[0].mxu0
        %v530 = vadd.f32 %v297, %v529
        %v531 = vpop.f32.mrb[0].mxu0
        %v532 = vpop.f32.mrb[0].mxu0
        %v533 = vadd.f32 %v297, %v532
        %v534 = vpop.f32.mrb[0].mxu0
        %535 = vmatprep.mubr.bf16.mxu0 0
        %536 = vmatmul.mubr.bf16.gmra.mrb[0].mxu0 %v417
        %v537 = vpop.f32.mrb[0].mxu0
        %v538 = vadd.f32 %v297, %v537
        %v539 = vpop.f32.mrb[0].mxu0
        %v540 = vpop.f32.mrb[0].mxu0
        %v541 = vadd.f32 %v297, %v540
        %v542 = vpop.f32.mrb[0].mxu0
        %543 = vmatprep.mubr.bf16.mxu0 0
        %544 = vmatmul.mubr.bf16.gmra.mrb[0].mxu0 %v420
        %v545 = vpop.f32.mrb[0].mxu0
        %v546 = vadd.f32 %v297, %v545
        %v547 = vpop.f32.mrb[0].mxu0
        %v548 = vpop.f32.mrb[0].mxu0
        %v549 = vadd.f32 %v297, %v548
        %v550 = vpop.f32.mrb[0].mxu0
        %551 = vmatprep.mubr.bf16.mxu0 0
        %552 = vmatmul.mubr.bf16.gmra.mrb[0].mxu0 %v423
        %v553 = vpop.f32.mrb[0].mxu0
        %v554 = vadd.f32 %v297, %v553
        %v555 = vpop.f32.mrb[0].mxu0
        %v556 = vpop.f32.mrb[0].mxu0
        %v557 = vadd.f32 %v297, %v556
        %v558 = vpop.f32.mrb[0].mxu0
        %559 = vmatprep.mubr.bf16.mxu0 0
        %560 = vmatmul.mubr.bf16.gmra.mrb[0].mxu0 %v426
        %v561 = vpop.f32.mrb[0].mxu0
        %v562 = vadd.f32 %v297, %v561
        %v563 = vpop.f32.mrb[0].mxu0
        %v564 = vpop.f32.mrb[0].mxu0
        %v565 = vadd.f32 %v297, %v564
        %v566 = vpop.f32.mrb[0].mxu0
        %567 = vmatprep.mubr.bf16.mxu0 0
        %568 = vmatmul.mubr.bf16.gmra.mrb[0].mxu0 %v429
        %v569 = vpop.f32.mrb[0].mxu0
        %v570 = vadd.f32 %v297, %v569
        %v571 = vpop.f32.mrb[0].mxu0
        %v572 = vpop.f32.mrb[0].mxu0
        %v573 = vadd.f32 %v297, %v572
        %v574 = vpop.f32.mrb[0].mxu0
        %575 = vmatprep.mubr.bf16.mxu0 0
        %576 = vmatmul.mubr.bf16.gmra.mrb[0].mxu0 %v432
        %v577 = vpop.f32.mrb[0].mxu0
        %v578 = vadd.f32 %v297, %v577
        %v579 = vpop.f32.mrb[0].mxu0
        %v580 = vpop.f32.mrb[0].mxu0
        %v581 = vadd.f32 %v297, %v580
        %v582 = vpop.f32.mrb[0].mxu0
        %583 = vmatprep.mubr.bf16.mxu0 0
        %584 = vmatmul.mubr.bf16.gmra.mrb[0].mxu0 %v435
        %v585 = vpop.f32.mrb[0].mxu0
        %v586 = vadd.f32 %v297, %v585
        %v587 = vpop.f32.mrb[0].mxu0
        %v588 = vpop.f32.mrb[0].mxu0
        %v589 = vadd.f32 %v297, %v588
        %v590 = vpop.f32.mrb[0].mxu0
        %591 = vmatprep.mubr.bf16.mxu0 0
        %592 = vmatmul.mubr.bf16.gmra.mrb[0].mxu0 %v438
        %v593 = vpop.f32.mrb[0].mxu0
        %v594 = vadd.f32 %v297, %v593
        %v595 = vpop.f32.mrb[0].mxu0
        %v596 = vpop.f32.mrb[0].mxu0
        %v597 = vadd.f32 %v297, %v596
        %v598 = vpop.f32.mrb[0].mxu0
        %599 = vmatprep.mubr.bf16.mxu0 0
        %600 = vmatmul.mubr.bf16.gmra.mrb[0].mxu0 %v441
        %v601 = vpop.f32.mrb[0].mxu0
        %v602 = vadd.f32 %v297, %v601
        %v603 = vpop.f32.mrb[0].mxu0
        %v604 = vpop.f32.mrb[0].mxu0
        %v605 = vadd.f32 %v297, %v604
        %v606 = vpop.f32.mrb[0].mxu0
        %607 = vdwg.mxu0
        %v608 = vmax.f32 %v482, 0.0
        %v609 = vmax.f32 %v485, 0.0
        %v610 = vmax.f32 %v490, 0.0
        %v611 = vmax.f32 %v493, 0.0
        %v612 = vmax.f32 %v498, 0.0
        %v613 = vmax.f32 %v501, 0.0
        %v614 = vmax.f32 %v506, 0.0
        %v615 = vmax.f32 %v509, 0.0
        %v616 = vmax.f32 %v514, 0.0
        %v617 = vmax.f32 %v517, 0.0
        %v618 = vmax.f32 %v522, 0.0
        %v619 = vmax.f32 %v525, 0.0
        %v620 = vmax.f32 %v530, 0.0
        %v621 = vmax.f32 %v533, 0.0
        %v622 = vmax.f32 %v538, 0.0
        %v623 = vmax.f32 %v541, 0.0
        %v624 = vmax.f32 %v546, 0.0
        %v625 = vmax.f32 %v549, 0.0
        %v626 = vmax.f32 %v554, 0.0
        %v627 = vmax.f32 %v557, 0.0
        %v628 = vmax.f32 %v562, 0.0
        %v629 = vmax.f32 %v565, 0.0
        %v630 = vmax.f32 %v570, 0.0
        %v631 = vmax.f32 %v573, 0.0
        %v632 = vmax.f32 %v578, 0.0
        %v633 = vmax.f32 %v581, 0.0
        %v634 = vmax.f32 %v586, 0.0
        %v635 = vmax.f32 %v589, 0.0
        %v636 = vmax.f32 %v594, 0.0
        %v637 = vmax.f32 %v597, 0.0
        %v638 = vmax.f32 %v602, 0.0
        %v639 = vmax.f32 %v605, 0.0
        %v640 = vpack.c.bf16 %v609, %v608
        %v641 = vpack.c.bf16 %v611, %v610
        %v642 = vpack.c.bf16 %v613, %v612
        %v643 = vpack.c.bf16 %v615, %v614
        %v644 = vpack.c.bf16 %v617, %v616
        %v645 = vpack.c.bf16 %v619, %v618
        %v646 = vpack.c.bf16 %v621, %v620
        %v647 = vpack.c.bf16 %v623, %v622
        %v648 = vpack.c.bf16 %v625, %v624
        %v649 = vpack.c.bf16 %v627, %v626
        %v650 = vpack.c.bf16 %v629, %v628
        %v651 = vpack.c.bf16 %v631, %v630
        %v652 = vpack.c.bf16 %v633, %v632
        %v653 = vpack.c.bf16 %v635, %v634
        %v654 = vpack.c.bf16 %v637, %v636
        %v655 = vpack.c.bf16 %v639, %v638
        %v656 = vld [vmem:[%s3] sm:$0xf]
        %v657 = vld [vmem:[%s4] sm:$0xff]
        %659 = vset.pattern.permute.xlu0 0
        %660 = vperm.xlu0 %659, %v657
        %v661 = vpop.permute.xlu0 %660
        %vm663 = vcmask 130048
        %v665 = vsel %vm663, %v656, 0
        %v668 = vsel %vm663, %v640, 0
        %v671 = vsel %vm663, %v641, 0
        %v674 = vsel %vm663, %v642, 0
        %v677 = vsel %vm663, %v643, 0
        %v680 = vsel %vm663, %v644, 0
        %v683 = vsel %vm663, %v645, 0
        %v686 = vsel %vm663, %v646, 0
        %v689 = vsel %vm663, %v647, 0
        %v692 = vsel %vm663, %v648, 0
        %v695 = vsel %vm663, %v649, 0
        %v698 = vsel %vm663, %v650, 0
        %v701 = vsel %vm663, %v651, 0
        %v704 = vsel %vm663, %v652, 0
        %v707 = vsel %vm663, %v653, 0
        %v710 = vsel %vm663, %v654, 0
        %v713 = vsel %vm663, %v655, 0
        %715 = vmatprep.subr.bf16.mxu0 0
        %716 = vmatpush1.bf16.xpose.msra.mxu0 %v668
        %717 = vmatprep.subr.bf16.mxu0 0
        %718 = vmatpush1.bf16.xpose.msra.mxu0 %v671
        %719 = vmatprep.subr.bf16.mxu0 0
        %720 = vmatpush1.bf16.xpose.msra.mxu0 %v674
        %721 = vmatprep.subr.bf16.mxu0 0
        %722 = vmatpush1.bf16.xpose.msra.mxu0 %v677
        %723 = vmatprep.subr.bf16.mxu0 0
        %724 = vmatpush1.bf16.xpose.msra.mxu0 %v680
        %725 = vmatprep.subr.bf16.mxu0 0
        %726 = vmatpush1.bf16.xpose.msra.mxu0 %v683
        %727 = vmatprep.subr.bf16.mxu0 0
        %728 = vmatpush1.bf16.xpose.msra.mxu0 %v686
        %729 = vmatprep.subr.bf16.mxu0 0
        %730 = vmatpush1.bf16.xpose.msra.mxu0 %v689
        %731 = vmatprep.subr.bf16.mxu0 0
        %732 = vmatpush1.bf16.xpose.msra.mxu0 %v692
        %733 = vmatprep.subr.bf16.mxu0 0
        %734 = vmatpush1.bf16.xpose.msra.mxu0 %v695
        %735 = vmatprep.subr.bf16.mxu0 0
        %736 = vmatpush1.bf16.xpose.msra.mxu0 %v698
        %737 = vmatprep.subr.bf16.mxu0 0
        %738 = vmatpush1.bf16.xpose.msra.mxu0 %v701
        %739 = vmatprep.subr.bf16.mxu0 0
        %740 = vmatpush1.bf16.xpose.msra.mxu0 %v704
        %741 = vmatprep.subr.bf16.mxu0 0
        %742 = vmatpush1.bf16.xpose.msra.mxu0 %v707
        %743 = vmatprep.subr.bf16.mxu0 0
        %744 = vmatpush1.bf16.xpose.msra.mxu0 %v710
        %745 = vmatprep.subr.bf16.mxu0 0
        %746 = vmatpush1.bf16.xpose.msra.mxu0 %v713
        %747 = vmatprep.mubr.bf16.mxu0 0
        %748 = vmatmul.mubr.bf16.gmra.mrb[0].mxu0 %v665
        %v749 = vpop.f32.mrb[0].mxu0
        %v750 = vadd.f32 %v661, %v749
        %v751 = vpop.f32.mrb[0].mxu0
        %v752 = vadd.f32 %v661, %v751
        %v753 = vpop.f32.mrb[0].mxu0
        %v754 = vpop.f32.mrb[0].mxu0
        %755 = vdwg.mxu0
        %v756 = vpack.c.bf16 %v750, %v750
        %v757 = vpack.c.bf16 %v752, %v752
        %v760 = vunpack.c.l.b16 %v756
        %v761 = vunpack.c.l.b16 %v757
        %v762 = vpack.c.b16 %v761, %v760
        %764 = vst [vmem:[%s242] sm:$0xff] %v762
        %s765 = sand.u32 %s155, 1
        %s766 = scalar_lea.sflag [#allocation3], %s765
        %s767 = sand.u32 %s155, 1
        %s768 = smul.addr %s767, 8
        %s769 = scalar_lea.vmem [#allocation2], %s768
        // Predicated region
        $region41: #{tpu_custom_call.1} parent=39 // pred_check
          %p770 = pneg %p165
        $region42: #{tpu_custom_call.1} parent=39 // pred_check_branch
          %772 = sbr.rel (%p770) target = $region44
        $region43: #{tpu_custom_call.1} parent=39 // pred_region
          %s773 = smul.u32 2, %s24
          %s775 = ssub.s32 128, 128
          %776 = vsyncadd %s766, %s775
          %s777 = smul.addr %s23, 4
          %s778 = sadd.s32 %s773, %s777
          %s779 = smul.addr %s778, 64
          %s780 = scalar_lea.hbm %s5, %s779
          %s782 = sshll.u32 %s769, 4
          %s783 = int_to_ptr.vmem [resolvable:$true] %s782
          %785 = dma.vmem_to_hbm [thread:$0]  %s783, 128, %s780, %s766
        $region44: #{tpu_custom_call.1} parent=39 // pred_fallthru
          _
      $region40: #{tpu_custom_call.1} parent=5 // pred_fallthru
        _
      %p786 = scmp.le.s32.totalorder 2, %s14
      // Predicated region
      $region45: #{tpu_custom_call.1} parent=5 // pred_check
        %p787 = pneg %p786
      $region46: #{tpu_custom_call.1} parent=5 // pred_check_branch
        %789 = sbr.rel (%p787) target = $region48
      $region47: #{tpu_custom_call.1} parent=5 // pred_region
        %s790 = ssub.s32 %s14, 2
        // Predicated region
        $region49: #{tpu_custom_call.1} parent=47 // pred_check
          %p791 = pneg %p171
        $region50: #{tpu_custom_call.1} parent=47 // pred_check_branch
          %793 = sbr.rel (%p791) target = $region52
        $region51: #{tpu_custom_call.1} parent=47 // pred_region
          %s794 = sand.u32 %s156, 1
          %s795 = scalar_lea.sflag [#allocation3], %s794
          %s796 = sand.u32 %s156, 1
          %s797 = smul.addr %s796, 8
          %s798 = scalar_lea.vmem [#allocation2], %s797
          %799 = dma.done %s795, 128
        $region52: #{tpu_custom_call.1} parent=47 // pred_fallthru
          _
      $region48: #{tpu_custom_call.1} parent=5 // pred_fallthru
        _
    $region6: #{tpu_custom_call.1} parent=1 // loop_footer
      %s18 = sadd.s32 1, %s14
    $region7: #{tpu_custom_call.1} parent=1 // loop_footer_branch
      %13 = sbr.rel target = $region3
    $region8: #{tpu_custom_call.1} parent=1 // loop_exit
      _
    %800 = vsyncpa [#allocation3], 1
    %s801 = scalar_lea.sflag [#allocation3], 1
    %802 = vsyncpa %s801, 1

</llo_original>
